<compile_context>
chip_gen: v6e
topology: v6e:2x2x1
jax: 0.10.0
libtpu: 0.0.40
codegen_flags: <defaults>
</compile_context>

<pallas_src>
import jax
import jax.numpy as jnp
from jax.experimental import pallas as pl
from jax.experimental.pallas import tpu as pltpu

LN_EPS = 1e-6


def _conditioned_embedding_kernel(
    x_ref,      # VMEM (M, 2D)  bf16 - [layer_row | type_row] per pair
    w1_ref,     # VMEM (2D, H)  bf16 - W1 rows for the layer/type parts
    b1_ref,     # VMEM (1, H)   f32  - b1 + task_row @ W1[:D]  (task folded in)
    w2_ref,     # VMEM (H, D)   bf16
    b2_ref,     # VMEM (1, D)   f32
    gamma_ref,  # VMEM (1, D)   f32
    beta_ref,   # VMEM (1, D)   f32
    out_ref,    # VMEM (M, D)   f32
):
    # Linear 1: single K = 2D (= 256, the MXU's native K tile on v6e/v7x).
    # The shared task contribution is pre-folded into b1 by the wrapper.
    h = jnp.dot(x_ref[...], w1_ref[...],
                preferred_element_type=jnp.float32) + b1_ref[...]      # (M, H) f32
    h = jnp.maximum(h, 0.0)

    # Linear 2.
    y = jnp.dot(h.astype(w2_ref.dtype), w2_ref[...],
                preferred_element_type=jnp.float32) + b2_ref[...]      # (M, D) f32

    # LayerNorm over the feature (lane) axis, two-pass statistics, eps = 1e-6.
    mean = jnp.mean(y, axis=-1, keepdims=True)
    centered = y - mean
    var = jnp.mean(centered * centered, axis=-1, keepdims=True)
    inv = jax.lax.rsqrt(var + LN_EPS)
    out_ref[...] = centered * inv * gamma_ref[...] + beta_ref[...]


@jax.jit
def conditioned_embedding_batched(params, task_embedding, layer_ids, block_types):
    """Forward for a batch of (layer_id, block_type) pairs in a single pallas_call.

    task_embedding: (D,) f32 (shared); layer_ids/block_types: (M,) int32.
    Returns (M, D) f32.
    """
    d = task_embedding.shape[0]
    m = layer_ids.shape[0]
    m_pad = max(8, -(-m // 8) * 8)          # sublane-align the row count
    pad = m_pad - m
    if pad:
        layer_ids = jnp.concatenate(
            [layer_ids, jnp.zeros((pad,), layer_ids.dtype)])
        block_types = jnp.concatenate(
            [block_types, jnp.zeros((pad,), block_types.dtype)])

    w1 = params["w1"]                        # (3D, H), bf16 storage
    cdt = w1.dtype                           # MXU input dtype

    # Gather + concat the per-row embedding halves outside the kernel (tables
    # are tiny) and cast to the MXU input dtype once; the kernel body then has
    # no gather, no concat and no convert ops.
    layer_rows = jnp.take(params["layer_id_embeddings"], layer_ids, axis=0)   # (m_pad, D)
    type_rows = jnp.take(params["adapters_block_type"], block_types, axis=0)  # (m_pad, D)
    x_lt = jnp.concatenate([layer_rows, type_rows], axis=-1).astype(cdt)      # (m_pad, 2D)

    # Fold the shared task contribution into the first-layer bias (once).
    w1_task, w1_lt = w1[:d], w1[d:]                                           # (D,H), (2D,H)
    task_row = task_embedding[None, :].astype(cdt)                            # (1, D)
    b1_eff = (jnp.dot(task_row, w1_task, preferred_element_type=jnp.float32)
              + params["b1"])                                                 # (1, H) f32

    hdim = params["b1"].shape[-1]
    flops = 2 * m_pad * (2 * d * hdim + hdim * d)
    bytes_accessed = (x_lt.size * 2 + w1_lt.size * 2 + params["w2"].size * 2
                      + b1_eff.size * 4 + params["b2"].size * 4
                      + 2 * d * 4 + m_pad * d * 4)

    vmem = pl.BlockSpec(memory_space=pltpu.MemorySpace.VMEM)   # full-array, resident

    out = pl.pallas_call(
        _conditioned_embedding_kernel,
        out_shape=jax.ShapeDtypeStruct((m_pad, d), jnp.float32),
        in_specs=[vmem] * 7,
        out_specs=vmem,
        cost_estimate=pl.CostEstimate(flops=int(flops),
                                      transcendentals=int(m_pad),
                                      bytes_accessed=int(bytes_accessed)),
    )(
        x_lt, w1_lt, b1_eff,
        params["w2"], params["b2"],
        params["ln_gamma"], params["ln_beta"],
    )
    return out[:m]


def conditioned_embedding(params, task_embedding, layer_id, block_type):
    """Single-pair forward matching the PyTorch module's signature; returns (D,)."""
    out = conditioned_embedding_batched(
        params, task_embedding,
        jnp.asarray([layer_id], jnp.int32),
        jnp.asarray([block_type], jnp.int32))
    return out[0]


def init_params(key, task_embedding_dim, task_hidden_dim, num_layers,
                weight_dtype=jnp.bfloat16):
    """Synthetic params matching the module's shapes.

    Linear weights are stored transposed as (in, out), in bf16 (MXU dtype);
    biases / LN affine / embedding tables stay f32.
    """
    d, h = task_embedding_dim, task_hidden_dim
    ks = jax.random.split(key, 6)
    return {
        "layer_id_embeddings": jax.random.normal(ks[0], (num_layers, d), jnp.float32),
        "adapters_block_type": jax.random.normal(ks[1], (2, d), jnp.float32),
        "w1": (jax.random.normal(ks[2], (3 * d, h), jnp.float32)
               / jnp.sqrt(3.0 * d)).astype(weight_dtype),
        "b1": jax.random.normal(ks[3], (1, h), jnp.float32) * 0.01,
        "w2": (jax.random.normal(ks[4], (h, d), jnp.float32)
               / jnp.sqrt(1.0 * h)).astype(weight_dtype),
        "b2": jax.random.normal(ks[5], (1, d), jnp.float32) * 0.01,
        "ln_gamma": jnp.ones((1, d), jnp.float32),
        "ln_beta": jnp.zeros((1, d), jnp.float32),
    }


def reference(params, task_embedding, layer_ids, block_types):
    """Pure-JAX reference with the same numerics (bf16 storage / f32 accumulation)."""
    f32 = jnp.float32
    cdt = params["w1"].dtype
    round_in = lambda x: x.astype(cdt).astype(f32)      # mirror the kernel's MXU-input cast
    hp = jax.lax.Precision.HIGHEST

    layer_rows = params["layer_id_embeddings"][layer_ids]          # (M, D)
    type_rows = params["adapters_block_type"][block_types]         # (M, D)
    task = jnp.broadcast_to(task_embedding[None, :], layer_rows.shape)
    x = jnp.concatenate([task, layer_rows, type_rows], axis=-1)    # (M, 3D)

    w1 = params["w1"].astype(f32)
    w2 = params["w2"].astype(f32)
    h = jnp.dot(round_in(x), w1, precision=hp) + params["b1"]
    h = jnp.maximum(h, 0.0)
    y = jnp.dot(round_in(h), w2, precision=hp) + params["b2"]

    mean = jnp.mean(y, axis=-1, keepdims=True)
    var = jnp.mean((y - mean) ** 2, axis=-1, keepdims=True)
    out = (y - mean) / jnp.sqrt(var + LN_EPS)
    return out * params["ln_gamma"] + params["ln_beta"]


if __name__ == "__main__":
    TASK_EMBEDDING_DIM = 128   # D
    TASK_HIDDEN_DIM = 128      # H (config.task_hidden_dim)
    NUM_LAYERS = 12

    key = jax.random.PRNGKey(0)
    pkey, tkey = jax.random.split(key)
    params = init_params(pkey, TASK_EMBEDDING_DIM, TASK_HIDDEN_DIM, NUM_LAYERS)
    task_embedding = jax.random.normal(tkey, (TASK_EMBEDDING_DIM,), jnp.float32)

    # Batched: every (layer_id, block_type) combination (12 * 2 = 24 rows) in ONE call.
    layer_ids = jnp.repeat(jnp.arange(NUM_LAYERS, dtype=jnp.int32), 2)
    block_types = jnp.tile(jnp.arange(2, dtype=jnp.int32), NUM_LAYERS)

    out = conditioned_embedding_batched(params, task_embedding, layer_ids, block_types)
    out = jax.block_until_ready(out)
    ref = reference(params, task_embedding, layer_ids, block_types)
    assert out.shape == (NUM_LAYERS * 2, TASK_EMBEDDING_DIM)
    assert jnp.allclose(out, ref, atol=2e-4, rtol=2e-4), \
        f"batched mismatch, max abs err {float(jnp.max(jnp.abs(out - ref)))}"

    # Single-pair call (the original module's forward signature).
    single = jax.block_until_ready(
        conditioned_embedding(params, task_embedding, 3, 1))
    ref_single = reference(params, task_embedding,
                           jnp.asarray([3], jnp.int32), jnp.asarray([1], jnp.int32))[0]
    assert single.shape == (TASK_EMBEDDING_DIM,)
    assert jnp.allclose(single, ref_single, atol=2e-4, rtol=2e-4), "single-pair mismatch"

    print("KERNEL_OK")
</pallas_src>

<mosaic_0001>
module attributes {stable_mosaic.version = 11 : i64} {
  func.func @_conditioned_embedding_kernel(%arg0: memref<24x256xbf16, #tpu.memory_space<vmem>>, %arg1: memref<256x128xbf16, #tpu.memory_space<vmem>>, %arg2: memref<1x128xf32, #tpu.memory_space<vmem>>, %arg3: memref<128x128xbf16, #tpu.memory_space<vmem>>, %arg4: memref<1x128xf32, #tpu.memory_space<vmem>>, %arg5: memref<1x128xf32, #tpu.memory_space<vmem>>, %arg6: memref<1x128xf32, #tpu.memory_space<vmem>>, %arg7: memref<24x128xf32, #tpu.memory_space<vmem>>) attributes {dimension_semantics = [], scalar_prefetch = 0 : i64, scratch_operands = 0 : i64, tpu.core_type = #tpu.core_type<tc>} {
    %c0 = arith.constant 0 : index
    %c0_0 = arith.constant 0 : index
    %0 = vector.load %arg0[%c0, %c0_0] : memref<24x256xbf16, #tpu.memory_space<vmem>>, vector<24x256xbf16>
    %c0_1 = arith.constant 0 : index
    %c0_2 = arith.constant 0 : index
    %1 = vector.load %arg1[%c0_1, %c0_2] : memref<256x128xbf16, #tpu.memory_space<vmem>>, vector<256x128xbf16>
    %cst = arith.constant dense<0.000000e+00> : vector<24x128xf32>
    %2 = tpu.matmul %0, %1, %cst {dimension_numbers = #tpu.dot_dimension_numbers<[1], [0], [0], [1], [0, 0, 1, 1], [], []>} : vector<24x256xbf16>, vector<256x128xbf16>, vector<24x128xf32> -> vector<24x128xf32>
    %c0_3 = arith.constant 0 : index
    %c0_4 = arith.constant 0 : index
    %3 = vector.load %arg2[%c0_3, %c0_4] : memref<1x128xf32, #tpu.memory_space<vmem>>, vector<1x128xf32>
    %4 = vector.broadcast %3 : vector<1x128xf32> to vector<24x128xf32>
    %5 = arith.addf %2, %4 : vector<24x128xf32>
    %cst_5 = arith.constant 0.000000e+00 : f32
    %6 = vector.broadcast %cst_5 : f32 to vector<24x128xf32>
    %7 = arith.maximumf %5, %6 : vector<24x128xf32>
    %8 = arith.truncf %7 : vector<24x128xf32> to vector<24x128xbf16>
    %c0_6 = arith.constant 0 : index
    %c0_7 = arith.constant 0 : index
    %9 = vector.load %arg3[%c0_6, %c0_7] : memref<128x128xbf16, #tpu.memory_space<vmem>>, vector<128x128xbf16>
    %cst_8 = arith.constant dense<0.000000e+00> : vector<24x128xf32>
    %10 = tpu.matmul %8, %9, %cst_8 {dimension_numbers = #tpu.dot_dimension_numbers<[1], [0], [0], [1], [0, 0, 1, 1], [], []>} : vector<24x128xbf16>, vector<128x128xbf16>, vector<24x128xf32> -> vector<24x128xf32>
    %c0_9 = arith.constant 0 : index
    %c0_10 = arith.constant 0 : index
    %11 = vector.load %arg4[%c0_9, %c0_10] : memref<1x128xf32, #tpu.memory_space<vmem>>, vector<1x128xf32>
    %12 = vector.broadcast %11 : vector<1x128xf32> to vector<24x128xf32>
    %13 = arith.addf %10, %12 : vector<24x128xf32>
    %cst_11 = arith.constant dense<0.000000e+00> : vector<24xf32>
    %14 = vector.multi_reduction <add>, %13, %cst_11 [1] : vector<24x128xf32> to vector<24xf32>
    %15 = vector.shape_cast %14 : vector<24xf32> to vector<24x1xf32>
    %cst_12 = arith.constant 1.280000e+02 : f32
    %16 = vector.broadcast %cst_12 : f32 to vector<24x1xf32>
    %17 = arith.divf %15, %16 : vector<24x1xf32>
    %18 = vector.broadcast %17 : vector<24x1xf32> to vector<24x128xf32>
    %19 = arith.subf %13, %18 : vector<24x128xf32>
    %20 = arith.mulf %19, %19 : vector<24x128xf32>
    %cst_13 = arith.constant dense<0.000000e+00> : vector<24xf32>
    %21 = vector.multi_reduction <add>, %20, %cst_13 [1] : vector<24x128xf32> to vector<24xf32>
    %22 = vector.shape_cast %21 : vector<24xf32> to vector<24x1xf32>
    %cst_14 = arith.constant 1.280000e+02 : f32
    %23 = vector.broadcast %cst_14 : f32 to vector<24x1xf32>
    %24 = arith.divf %22, %23 : vector<24x1xf32>
    %cst_15 = arith.constant 9.99999997E-7 : f32
    %25 = vector.broadcast %cst_15 : f32 to vector<24x1xf32>
    %26 = arith.addf %24, %25 : vector<24x1xf32>
    %27 = math.rsqrt %26 : vector<24x1xf32>
    %28 = vector.broadcast %27 : vector<24x1xf32> to vector<24x128xf32>
    %29 = arith.mulf %19, %28 : vector<24x128xf32>
    %c0_16 = arith.constant 0 : index
    %c0_17 = arith.constant 0 : index
    %30 = vector.load %arg5[%c0_16, %c0_17] : memref<1x128xf32, #tpu.memory_space<vmem>>, vector<1x128xf32>
    %31 = vector.broadcast %30 : vector<1x128xf32> to vector<24x128xf32>
    %32 = arith.mulf %29, %31 : vector<24x128xf32>
    %c0_18 = arith.constant 0 : index
    %c0_19 = arith.constant 0 : index
    %33 = vector.load %arg6[%c0_18, %c0_19] : memref<1x128xf32, #tpu.memory_space<vmem>>, vector<1x128xf32>
    %34 = vector.broadcast %33 : vector<1x128xf32> to vector<24x128xf32>
    %35 = arith.addf %32, %34 : vector<24x128xf32>
    %c0_20 = arith.constant 0 : index
    %c0_21 = arith.constant 0 : index
    %36 = vector.load %arg7[%c0_20, %c0_21] : memref<24x128xf32, #tpu.memory_space<vmem>>, vector<24x128xf32>
    tpu.vector_store %arg7[%c0_20, %c0_21], %35 {strides = array<i32>} : memref<24x128xf32, #tpu.memory_space<vmem>>, vector<24x128xf32>,
    return
  }
}

</mosaic_0001>

<llo_original>
// kernel: conditioned_embedding_batched.1
$region0: #{conditioned_embedding_batched.1}
  #allocation0 [shape = 'u32[]', space=smem, size = 0x4, offset = 0x4, fixed_abs, tag = 'smem constant byte address 0x4 - core index']
  #allocation1 [shape = 'u32[144,128]{1,0:T(1,128)}', space=vmem, size = 0x12000, scoped, tag = 'internal scratch']
  %s0 = inlined_call_operand.vmem [shape: bf16[24,256], index: 0, kind: input, shape index: {}]
  %s1 = inlined_call_operand.vmem [shape: bf16[256,128], index: 1, kind: input, shape index: {}]
  %s2 = inlined_call_operand.vmem [shape: f32[1,128], index: 2, kind: input, shape index: {}]
  %s3 = inlined_call_operand.vmem [shape: bf16[128,128], index: 3, kind: input, shape index: {}]
  %s4 = inlined_call_operand.vmem [shape: f32[1,128], index: 4, kind: input, shape index: {}]
  %s5 = inlined_call_operand.vmem [shape: f32[1,128], index: 5, kind: input, shape index: {}]
  %s6 = inlined_call_operand.vmem [shape: f32[1,128], index: 6, kind: input, shape index: {}]
  %s7 = inlined_call_operand.hbm [shape: f32[24,128], index: 7, kind: output, shape index: {}]
  %s8 = sld [smem:[#allocation0]]
  $region38: #{conditioned_embedding_batched.1} parent=0
    _
  %s10 = ssub.s32 1, %s8
  %s11 = scalar_select 0, %s10, %s8
  $region1: #{conditioned_embedding_batched.1} parent=0
    #allocation2 [shape = 'u8[12288]{0}', space=vmem, size = 0x3000, scoped, tag = 'output window, operand 0, single buffered']
    #allocation3 [shape = 's32[1]{0}', space=sflag, size = 0x4, scoped, tag = 'scoped memory for conditioned_embedding_batched.1']
    %12 = vsyncpa [#allocation3], 0
    // Predicated region
    $region2: #{conditioned_embedding_batched.1} parent=1 // pred_check
      _
    $region3: #{conditioned_embedding_batched.1} parent=1 // pred_check_branch
      %14 = sbr.rel (0) target = $region5
    $region4: #{conditioned_embedding_batched.1} parent=1 // pred_region
      _
    $region5: #{conditioned_embedding_batched.1} parent=1 // pred_fallthru
      _
    // Predicated region
    $region6: #{conditioned_embedding_batched.1} parent=1 // pred_check
      _
    $region7: #{conditioned_embedding_batched.1} parent=1 // pred_check_branch
      %16 = sbr.rel (0) target = $region9
    $region8: #{conditioned_embedding_batched.1} parent=1 // pred_region
      _
    $region9: #{conditioned_embedding_batched.1} parent=1 // pred_fallthru
      _
    // Predicated region
    $region10: #{conditioned_embedding_batched.1} parent=1 // pred_check
      _
    $region11: #{conditioned_embedding_batched.1} parent=1 // pred_check_branch
      %18 = sbr.rel (0) target = $region13
    $region12: #{conditioned_embedding_batched.1} parent=1 // pred_region
      _
    $region13: #{conditioned_embedding_batched.1} parent=1 // pred_fallthru
      _
    // Predicated region
    $region14: #{conditioned_embedding_batched.1} parent=1 // pred_check
      _
    $region15: #{conditioned_embedding_batched.1} parent=1 // pred_check_branch
      %20 = sbr.rel (0) target = $region17
    $region16: #{conditioned_embedding_batched.1} parent=1 // pred_region
      _
    $region17: #{conditioned_embedding_batched.1} parent=1 // pred_fallthru
      _
    // Predicated region
    $region18: #{conditioned_embedding_batched.1} parent=1 // pred_check
      _
    $region19: #{conditioned_embedding_batched.1} parent=1 // pred_check_branch
      %22 = sbr.rel (0) target = $region21
    $region20: #{conditioned_embedding_batched.1} parent=1 // pred_region
      _
    $region21: #{conditioned_embedding_batched.1} parent=1 // pred_fallthru
      _
    // Predicated region
    $region22: #{conditioned_embedding_batched.1} parent=1 // pred_check
      _
    $region23: #{conditioned_embedding_batched.1} parent=1 // pred_check_branch
      %24 = sbr.rel (0) target = $region25
    $region24: #{conditioned_embedding_batched.1} parent=1 // pred_region
      _
    $region25: #{conditioned_embedding_batched.1} parent=1 // pred_fallthru
      _
    // Predicated region
    $region26: #{conditioned_embedding_batched.1} parent=1 // pred_check
      _
    $region27: #{conditioned_embedding_batched.1} parent=1 // pred_check_branch
      %26 = sbr.rel (0) target = $region29
    $region28: #{conditioned_embedding_batched.1} parent=1 // pred_region
      _
    $region29: #{conditioned_embedding_batched.1} parent=1 // pred_fallthru
      _
    %v28 = vld [vmem:[%s0] sm:$0xff]
    %v29 = vld [vmem:[%s0 + $0x8] sm:$0xff]
    %v30 = vld [vmem:[%s0 + $0x10] sm:$0xff]
    %v31 = vld [vmem:[%s1] sm:$0xf]
    %v32 = vld [vmem:[%s1 + $0x4] sm:$0xf]
    %v33 = vld [vmem:[%s1 + $0x8] sm:$0xf]
    %v34 = vld [vmem:[%s1 + $0xc] sm:$0xf]
    %v35 = vld [vmem:[%s1 + $0x10] sm:$0xf]
    %v36 = vld [vmem:[%s1 + $0x14] sm:$0xf]
    %v37 = vld [vmem:[%s1 + $0x18] sm:$0xf]
    %v38 = vld [vmem:[%s1 + $0x1c] sm:$0xf]
    %v39 = vld [vmem:[%s1 + $0x20] sm:$0xf]
    %v40 = vld [vmem:[%s1 + $0x24] sm:$0xf]
    %v41 = vld [vmem:[%s1 + $0x28] sm:$0xf]
    %v42 = vld [vmem:[%s1 + $0x2c] sm:$0xf]
    %v43 = vld [vmem:[%s1 + $0x30] sm:$0xf]
    %v44 = vld [vmem:[%s1 + $0x34] sm:$0xf]
    %v45 = vld [vmem:[%s1 + $0x38] sm:$0xf]
    %v46 = vld [vmem:[%s1 + $0x3c] sm:$0xf]
    %v47 = vld [vmem:[%s1 + $0x40] sm:$0xf]
    %v48 = vld [vmem:[%s1 + $0x44] sm:$0xf]
    %v49 = vld [vmem:[%s1 + $0x48] sm:$0xf]
    %v50 = vld [vmem:[%s1 + $0x4c] sm:$0xf]
    %v51 = vld [vmem:[%s1 + $0x50] sm:$0xf]
    %v52 = vld [vmem:[%s1 + $0x54] sm:$0xf]
    %v53 = vld [vmem:[%s1 + $0x58] sm:$0xf]
    %v54 = vld [vmem:[%s1 + $0x5c] sm:$0xf]
    %v55 = vld [vmem:[%s1 + $0x60] sm:$0xf]
    %v56 = vld [vmem:[%s1 + $0x64] sm:$0xf]
    %v57 = vld [vmem:[%s1 + $0x68] sm:$0xf]
    %v58 = vld [vmem:[%s1 + $0x6c] sm:$0xf]
    %v59 = vld [vmem:[%s1 + $0x70] sm:$0xf]
    %v60 = vld [vmem:[%s1 + $0x74] sm:$0xf]
    %v61 = vld [vmem:[%s1 + $0x78] sm:$0xf]
    %v62 = vld [vmem:[%s1 + $0x7c] sm:$0xf]
    %v63 = vld [vmem:[%s2] sm:$0x1]
    %v65 = vlaneseq
    %v66 = vshrl.u32 %v65, 7
    %v67 = vsub.s32 0, %v66
    %v68 = vrot.slane %v63, %v67
    %v73 = vunpack.c.l.b16 %v28
    %v74 = vunpack.c.h.b16 %v28
    %v75 = vunpack.c.l.b16 %v29
    %v76 = vunpack.c.h.b16 %v29
    %v77 = vunpack.c.l.b16 %v30
    %v78 = vunpack.c.h.b16 %v30
    %v79 = vpack.c.b16 %v75, %v73
    %v80 = vpack.c.b16 %v76, %v74
    %v81 = vpack.c.b16 %v77, %v77
    %v82 = vpack.c.b16 %v78, %v78
    %v119 = vunpack.c.l.b16 %v31
    %v120 = vunpack.c.l.b16 %v32
    %v121 = vunpack.c.l.b16 %v33
    %v122 = vunpack.c.l.b16 %v34
    %v123 = vunpack.c.l.b16 %v35
    %v124 = vunpack.c.l.b16 %v36
    %v125 = vunpack.c.l.b16 %v37
    %v126 = vunpack.c.l.b16 %v38
    %v127 = vunpack.c.l.b16 %v39
    %v128 = vunpack.c.l.b16 %v40
    %v129 = vunpack.c.l.b16 %v41
    %v130 = vunpack.c.l.b16 %v42
    %v131 = vunpack.c.l.b16 %v43
    %v132 = vunpack.c.l.b16 %v44
    %v133 = vunpack.c.l.b16 %v45
    %v134 = vunpack.c.l.b16 %v46
    %v135 = vunpack.c.l.b16 %v47
    %v136 = vunpack.c.l.b16 %v48
    %v137 = vunpack.c.l.b16 %v49
    %v138 = vunpack.c.l.b16 %v50
    %v139 = vunpack.c.l.b16 %v51
    %v140 = vunpack.c.l.b16 %v52
    %v141 = vunpack.c.l.b16 %v53
    %v142 = vunpack.c.l.b16 %v54
    %v143 = vunpack.c.l.b16 %v55
    %v144 = vunpack.c.l.b16 %v56
    %v145 = vunpack.c.l.b16 %v57
    %v146 = vunpack.c.l.b16 %v58
    %v147 = vunpack.c.l.b16 %v59
    %v148 = vunpack.c.l.b16 %v60
    %v149 = vunpack.c.l.b16 %v61
    %v150 = vunpack.c.l.b16 %v62
    %v151 = vpack.c.b16 %v120, %v119
    %v152 = vpack.c.b16 %v122, %v121
    %v153 = vpack.c.b16 %v124, %v123
    %v154 = vpack.c.b16 %v126, %v125
    %v155 = vpack.c.b16 %v128, %v127
    %v156 = vpack.c.b16 %v130, %v129
    %v157 = vpack.c.b16 %v132, %v131
    %v158 = vpack.c.b16 %v134, %v133
    %v159 = vpack.c.b16 %v136, %v135
    %v160 = vpack.c.b16 %v138, %v137
    %v161 = vpack.c.b16 %v140, %v139
    %v162 = vpack.c.b16 %v142, %v141
    %v163 = vpack.c.b16 %v144, %v143
    %v164 = vpack.c.b16 %v146, %v145
    %v165 = vpack.c.b16 %v148, %v147
    %v166 = vpack.c.b16 %v150, %v149
    %183 = vmatprep.subr.bf16.mxu0 0
    %184 = vmatpush1.bf16.msra.mxu0 %v158
    %185 = vmatprep.subr.bf16.mxu0 0
    %186 = vmatpush1.bf16.msra.mxu0 %v157
    %187 = vmatprep.subr.bf16.mxu0 0
    %188 = vmatpush1.bf16.msra.mxu0 %v156
    %189 = vmatprep.subr.bf16.mxu0 0
    %190 = vmatpush1.bf16.msra.mxu0 %v155
    %191 = vmatprep.subr.bf16.mxu0 0
    %192 = vmatpush1.bf16.msra.mxu0 %v154
    %193 = vmatprep.subr.bf16.mxu0 0
    %194 = vmatpush1.bf16.msra.mxu0 %v153
    %195 = vmatprep.subr.bf16.mxu0 0
    %196 = vmatpush1.bf16.msra.mxu0 %v152
    %197 = vmatprep.subr.bf16.mxu0 0
    %198 = vmatpush1.bf16.msra.mxu0 %v151
    %199 = vmatprep.subr.bf16.mxu0 0
    %200 = vmatpush2.bf16.msra.mxu0 %v166
    %201 = vmatprep.subr.bf16.mxu0 0
    %202 = vmatpush2.bf16.msra.mxu0 %v165
    %203 = vmatprep.subr.bf16.mxu0 0
    %204 = vmatpush2.bf16.msra.mxu0 %v164
    %205 = vmatprep.subr.bf16.mxu0 0
    %206 = vmatpush2.bf16.msra.mxu0 %v163
    %207 = vmatprep.subr.bf16.mxu0 0
    %208 = vmatpush2.bf16.msra.mxu0 %v162
    %209 = vmatprep.subr.bf16.mxu0 0
    %210 = vmatpush2.bf16.msra.mxu0 %v161
    %211 = vmatprep.subr.bf16.mxu0 0
    %212 = vmatpush2.bf16.msra.mxu0 %v160
    %213 = vmatprep.subr.bf16.mxu0 0
    %214 = vmatpush2.bf16.msra.mxu0 %v159
    %215 = vmatprep.mubr.bf16.mxu0 %v80
    %216 = vmatmul.mubr.bf16.gmra.mxu0 %v79
    %v217 = vpop.f32.mrf.mxu0
    %v218 = vadd.f32 %v68, %v217
    %v219 = vpop.f32.mrf.mxu0
    %v220 = vpop.f32.mrf.mxu0
    %v221 = vadd.f32 %v68, %v220
    %v222 = vpop.f32.mrf.mxu0
    %223 = vmatprep.mubr.bf16.mxu0 %v82
    %224 = vmatmul.mubr.bf16.gmra.mxu0 %v81
    %v225 = vpop.f32.mrf.mxu0
    %v226 = vadd.f32 %v68, %v225
    %v227 = vpop.f32.mrf.mxu0
    %v228 = vpop.f32.mrf.mxu0
    %v229 = vpop.f32.mrf.mxu0
    %230 = vdwg.mxu0
    %v231 = vmax.f32 %v218, 0.0
    %v232 = vmax.f32 %v221, 0.0
    %v233 = vmax.f32 %v226, 0.0
    %v234 = vpack.c.bf16 %v232, %v231
    %v235 = vpack.c.bf16 %v233, %v233
    %v236 = vld [vmem:[%s3] sm:$0xf]
    %v237 = vld [vmem:[%s3 + $0x4] sm:$0xf]
    %v238 = vld [vmem:[%s3 + $0x8] sm:$0xf]
    %v239 = vld [vmem:[%s3 + $0xc] sm:$0xf]
    %v240 = vld [vmem:[%s3 + $0x10] sm:$0xf]
    %v241 = vld [vmem:[%s3 + $0x14] sm:$0xf]
    %v242 = vld [vmem:[%s3 + $0x18] sm:$0xf]
    %v243 = vld [vmem:[%s3 + $0x1c] sm:$0xf]
    %v244 = vld [vmem:[%s3 + $0x20] sm:$0xf]
    %v245 = vld [vmem:[%s3 + $0x24] sm:$0xf]
    %v246 = vld [vmem:[%s3 + $0x28] sm:$0xf]
    %v247 = vld [vmem:[%s3 + $0x2c] sm:$0xf]
    %v248 = vld [vmem:[%s3 + $0x30] sm:$0xf]
    %v249 = vld [vmem:[%s3 + $0x34] sm:$0xf]
    %v250 = vld [vmem:[%s3 + $0x38] sm:$0xf]
    %v251 = vld [vmem:[%s3 + $0x3c] sm:$0xf]
    %v252 = vld [vmem:[%s4] sm:$0x1]
    %v254 = vlaneseq
    %v255 = vshrl.u32 %v254, 7
    %v256 = vsub.s32 0, %v255
    %v257 = vrot.slane %v252, %v256
    %v275 = vunpack.c.l.b16 %v236
    %v276 = vunpack.c.l.b16 %v237
    %v277 = vunpack.c.l.b16 %v238
    %v278 = vunpack.c.l.b16 %v239
    %v279 = vunpack.c.l.b16 %v240
    %v280 = vunpack.c.l.b16 %v241
    %v281 = vunpack.c.l.b16 %v242
    %v282 = vunpack.c.l.b16 %v243
    %v283 = vunpack.c.l.b16 %v244
    %v284 = vunpack.c.l.b16 %v245
    %v285 = vunpack.c.l.b16 %v246
    %v286 = vunpack.c.l.b16 %v247
    %v287 = vunpack.c.l.b16 %v248
    %v288 = vunpack.c.l.b16 %v249
    %v289 = vunpack.c.l.b16 %v250
    %v290 = vunpack.c.l.b16 %v251
    %v291 = vpack.c.b16 %v276, %v275
    %v292 = vpack.c.b16 %v278, %v277
    %v293 = vpack.c.b16 %v280, %v279
    %v294 = vpack.c.b16 %v282, %v281
    %v295 = vpack.c.b16 %v284, %v283
    %v296 = vpack.c.b16 %v286, %v285
    %v297 = vpack.c.b16 %v288, %v287
    %v298 = vpack.c.b16 %v290, %v289
    %307 = vmatprep.subr.bf16.mxu0 0
    %308 = vmatpush1.bf16.msra.mxu0 %v298
    %309 = vmatprep.subr.bf16.mxu0 0
    %310 = vmatpush1.bf16.msra.mxu0 %v297
    %311 = vmatprep.subr.bf16.mxu0 0
    %312 = vmatpush1.bf16.msra.mxu0 %v296
    %313 = vmatprep.subr.bf16.mxu0 0
    %314 = vmatpush1.bf16.msra.mxu0 %v295
    %315 = vmatprep.subr.bf16.mxu0 0
    %316 = vmatpush1.bf16.msra.mxu0 %v294
    %317 = vmatprep.subr.bf16.mxu0 0
    %318 = vmatpush1.bf16.msra.mxu0 %v293
    %319 = vmatprep.subr.bf16.mxu0 0
    %320 = vmatpush1.bf16.msra.mxu0 %v292
    %321 = vmatprep.subr.bf16.mxu0 0
    %322 = vmatpush1.bf16.msra.mxu0 %v291
    %323 = vmatprep.subr.bf16.mxu0 0
    %324 = vmatpush2.bf16.msra.mxu0 0
    %325 = vmatprep.subr.bf16.mxu0 0
    %326 = vmatpush2.bf16.msra.mxu0 0
    %327 = vmatprep.subr.bf16.mxu0 0
    %328 = vmatpush2.bf16.msra.mxu0 0
    %329 = vmatprep.subr.bf16.mxu0 0
    %330 = vmatpush2.bf16.msra.mxu0 0
    %331 = vmatprep.subr.bf16.mxu0 0
    %332 = vmatpush2.bf16.msra.mxu0 0
    %333 = vmatprep.subr.bf16.mxu0 0
    %334 = vmatpush2.bf16.msra.mxu0 0
    %335 = vmatprep.subr.bf16.mxu0 0
    %336 = vmatpush2.bf16.msra.mxu0 0
    %337 = vmatprep.subr.bf16.mxu0 0
    %338 = vmatpush2.bf16.msra.mxu0 0
    %339 = vmatprep.mubr.bf16.mxu0 0
    %340 = vmatmul.mubr.bf16.gmra.mxu0 %v234
    %v341 = vpop.f32.mrf.mxu0
    %v342 = vadd.f32 %v257, %v341
    %v343 = vpop.f32.mrf.mxu0
    %v344 = vpop.f32.mrf.mxu0
    %v345 = vadd.f32 %v257, %v344
    %v346 = vpop.f32.mrf.mxu0
    %347 = vmatprep.mubr.bf16.mxu0 0
    %348 = vmatmul.mubr.bf16.gmra.mxu0 %v235
    %v349 = vpop.f32.mrf.mxu0
    %v350 = vadd.f32 %v257, %v349
    %v351 = vpop.f32.mrf.mxu0
    %v352 = vpop.f32.mrf.mxu0
    %v353 = vpop.f32.mrf.mxu0
    %354 = vdwg.mxu0
    %355 = vadd.xlane.f32.xlu0 %v342
    %v356 = vpop.xlane.xlu0 %355
    %357 = vadd.xlane.f32.xlu0 %v345
    %v358 = vpop.xlane.xlu0 %357
    %359 = vadd.xlane.f32.xlu0 %v350
    %v360 = vpop.xlane.xlu0 %359
    %v361 = vrcp.pop 128.0
    %v362 = vmul.f32 %v356, %v361
    %v363 = vmul.f32 %v358, %v361
    %v364 = vmul.f32 %v360, %v361
    %v365 = vsub.f32 %v342, %v362
    %v366 = vsub.f32 %v345, %v363
    %v367 = vsub.f32 %v350, %v364
    %v368 = vmul.f32 %v365, %v365
    %v369 = vmul.f32 %v366, %v366
    %v370 = vmul.f32 %v367, %v367
    %371 = vadd.xlane.f32.xlu0 %v368
    %v372 = vpop.xlane.xlu0 %371
    %373 = vadd.xlane.f32.xlu0 %v369
    %v374 = vpop.xlane.xlu0 %373
    %375 = vadd.xlane.f32.xlu0 %v370
    %v376 = vpop.xlane.xlu0 %375
    %v377 = vmul.f32 %v372, %v361
    %v378 = vmul.f32 %v374, %v361
    %v379 = vmul.f32 %v376, %v361
    %v380 = vadd.f32 %v377, 1e-06
    %v381 = vadd.f32 %v378, 1e-06
    %v382 = vadd.f32 %v379, 1e-06
    %v383 = vrsqrt.pop %v380
    %v384 = vrsqrt.pop %v381
    %v385 = vrsqrt.pop %v382
    %v386 = vmul.f32 %v365, %v383
    %v387 = vmul.f32 %v366, %v384
    %v388 = vmul.f32 %v367, %v385
    %v389 = vld [vmem:[%s5] sm:$0x1]
    %v391 = vlaneseq
    %v392 = vshrl.u32 %v391, 7
    %v393 = vsub.s32 0, %v392
    %v394 = vrot.slane %v389, %v393
    %v396 = vmul.f32 %v386, %v394
    %v397 = vmul.f32 %v387, %v394
    %v398 = vmul.f32 %v388, %v394
    %v399 = vld [vmem:[%s6] sm:$0x1]
    %v401 = vlaneseq
    %v402 = vshrl.u32 %v401, 7
    %v403 = vsub.s32 0, %v402
    %v404 = vrot.slane %v399, %v403
    %v406 = vadd.f32 %v396, %v404
    %v407 = vadd.f32 %v397, %v404
    %v408 = vadd.f32 %v398, %v404
    %409 = vst [vmem:[#allocation2] sm:$0xff] %v406
    %410 = vst [vmem:[#allocation2 + $0x8] sm:$0xff] %v407
    %411 = vst [vmem:[#allocation2 + $0x10] sm:$0xff] %v408
    // Predicated region
    $region30: #{conditioned_embedding_batched.1} parent=1 // pred_check
      _
    $region31: #{conditioned_embedding_batched.1} parent=1 // pred_check_branch
      %413 = sbr.rel (0) target = $region33
    $region32: #{conditioned_embedding_batched.1} parent=1 // pred_region
      %s415 = ssub.s32 384, 384
      %416 = vsyncadd [#allocation3], %s415
      %s417 = sshll.u32 [#allocation2], 4
      %s418 = int_to_ptr.vmem [resolvable:$true] %s417
      %423 = dma.vmem_to_hbm [thread:$0]  %s418, 384, %s7, [#allocation3], 128, 128, 8
    $region33: #{conditioned_embedding_batched.1} parent=1 // pred_fallthru
      _
    // Predicated region
    $region34: #{conditioned_embedding_batched.1} parent=1 // pred_check
      _
    $region35: #{conditioned_embedding_batched.1} parent=1 // pred_check_branch
      %425 = sbr.rel (0) target = $region37
    $region36: #{conditioned_embedding_batched.1} parent=1 // pred_region
      %426 = dma.done [#allocation3], 384
    $region37: #{conditioned_embedding_batched.1} parent=1 // pred_fallthru
      _
    %427 = vsyncpa [#allocation3], 1

</llo_original>
